<compile_context>
chip_gen: v5e
topology: v5e:2x2
jax: 0.10.0
libtpu: 0.0.40
codegen_flags: <defaults>
</compile_context>

<pallas_src>
import functools

import jax
import jax.numpy as jnp
from jax.experimental import pallas as pl
from jax.experimental.pallas import tpu as pltpu


def _round_up(x, m):
    return (x + m - 1) // m * m


def _patch_embed_kernel(x_ref, w_ref, b_ref, pos_ref, o_ref):
    # x_ref:   (tm, Kp)  bf16 patch rows
    # w_ref:   (Kp, Np)  bf16 projection (grid-invariant)
    # b_ref:   (1,  Np)  f32 conv bias (grid-invariant)
    # pos_ref: (tm, Np)  f32 per-patch position embeddings (grid-invariant)
    acc = jnp.dot(x_ref[...], w_ref[...], preferred_element_type=jnp.float32)
    o_ref[...] = (acc + b_ref[...] + pos_ref[...]).astype(o_ref.dtype)


@functools.partial(jax.jit, static_argnames=("patch_size", "single_buffer"))
def _position_embeddings_impl(x, conv_w, conv_b, cls_token, pos_emb, *,
                              patch_size, single_buffer):
    B, C, H, W = x.shape
    P = patch_size
    hidden = conv_w.shape[0]
    hp, wp = H // P, W // P
    num_patches = hp * wp

    K = C * P * P
    Kp = _round_up(K, 128)          # lane-dense contraction dim
    Np = _round_up(hidden, 128)     # lane-dense output dim

    # ---- row-tile selection: whole batch elements per tile -------------------
    target_rows = 512
    bpt = max(1, target_rows // num_patches)
    if B >= 2:
        # keep at least 2 grid steps so both v7x TensorCores get work
        bpt = min(bpt, max(1, B // 2))
    while (bpt * num_patches) % 8 != 0:   # sublane alignment of the row tile
        bpt += 1
    tm = bpt * num_patches
    B_pad = _round_up(B, bpt)
    M_pad = B_pad * num_patches

    # ---- im2col glue (plain JAX): (B,C,H,W) -> (M_pad, Kp), (c,ph,pw) order --
    patches = x.reshape(B, C, hp, P, wp, P).transpose(0, 2, 4, 1, 3, 5)
    patches = patches.reshape(B, num_patches, K)
    if B_pad != B:
        patches = jnp.pad(patches, ((0, B_pad - B), (0, 0), (0, 0)))
    patches = patches.reshape(M_pad, K)
    if Kp != K:
        patches = jnp.pad(patches, ((0, 0), (0, Kp - K)))
    patches = patches.astype(jnp.bfloat16)                     # bf16 MXU operand

    # conv weight (hidden, C, P, P) -> (Kp, Np), zero-padded, bf16
    w_mat = jnp.transpose(conv_w.reshape(hidden, K))
    w_mat = jnp.pad(w_mat, ((0, Kp - K), (0, Np - hidden))).astype(jnp.bfloat16)
    b_mat = jnp.pad(conv_b.reshape(1, hidden),
                    ((0, 0), (0, Np - hidden))).astype(jnp.float32)

    # position embeddings for the patch rows, tiled once per row-tile
    # (grid-invariant because each tile spans whole batch elements)
    pos_patch = jnp.pad(pos_emb[0, 1:, :],
                        ((0, 0), (0, Np - hidden))).astype(jnp.float32)
    pos_tile = jnp.tile(pos_patch, (bpt, 1))                    # (tm, Np)

    invariant = {"pipeline_mode": pl.Buffered(1)} if single_buffer else {}

    out = pl.pallas_call(
        _patch_embed_kernel,
        out_shape=jax.ShapeDtypeStruct((M_pad, Np), jnp.float32),
        grid=(M_pad // tm,),
        in_specs=[
            pl.BlockSpec((tm, Kp), lambda i: (i, 0)),
            pl.BlockSpec((Kp, Np), lambda i: (0, 0), **invariant),
            pl.BlockSpec((1, Np), lambda i: (0, 0), **invariant),
            pl.BlockSpec((tm, Np), lambda i: (0, 0), **invariant),
        ],
        out_specs=pl.BlockSpec((tm, Np), lambda i: (i, 0)),
        compiler_params=pltpu.CompilerParams(
            dimension_semantics=("parallel",)),
    )(patches, w_mat, b_mat, pos_tile)

    patch_tokens = out[: B * num_patches, :hidden].reshape(B, num_patches, hidden)
    patch_tokens = patch_tokens.astype(x.dtype)

    # [CLS] token (+ its position embedding): tiny (B x hidden) epilogue in JAX.
    cls_row = (cls_token[0, 0, :] + pos_emb[0, 0, :]).astype(x.dtype)
    cls_rows = jnp.broadcast_to(cls_row, (B, 1, hidden))
    return jnp.concatenate([cls_rows, patch_tokens], axis=1)


def position_embeddings(x, conv_w, conv_b, cls_token, pos_emb, *, patch_size):
    """x: (B,C,H,W); conv_w: (hidden,C,P,P); conv_b: (hidden,);
    cls_token: (1,1,hidden); pos_emb: (1, num_patches+1, hidden).
    Returns (B, num_patches+1, hidden), matching PositionEmbeddings.forward (eval)."""
    try:
        return _position_embeddings_impl(
            x, conv_w, conv_b, cls_token, pos_emb,
            patch_size=patch_size, single_buffer=True)
    except Exception:
        # Fallback if this Pallas build rejects pipeline_mode=pl.Buffered(1):
        # default double-buffering of the grid-invariant operands.
        return _position_embeddings_impl(
            x, conv_w, conv_b, cls_token, pos_emb,
            patch_size=patch_size, single_buffer=False)


if __name__ == "__main__":
    config = dict(image_size=16, patch_size=4, num_channels=4, hidden_size=32,
                  hidden_dropout_prob=0.0)
    B = 2
    C = config["num_channels"]
    S = config["image_size"]
    P = config["patch_size"]
    HID = config["hidden_size"]
    num_patches = (S // P) ** 2

    key = jax.random.PRNGKey(0)
    kx, kw, kb, kc, kp = jax.random.split(key, 5)

    fan_in = C * P * P
    bound = 1.0 / (fan_in ** 0.5)
    conv_w = jax.random.uniform(kw, (HID, C, P, P), jnp.float32, -bound, bound)
    conv_b = jax.random.uniform(kb, (HID,), jnp.float32, -bound, bound)
    cls_token = jax.random.normal(kc, (1, 1, HID), jnp.float32)
    pos_emb = jax.random.normal(kp, (1, num_patches + 1, HID), jnp.float32)
    x = jax.random.normal(kx, (B, C, S, S), jnp.float32)

    out = position_embeddings(x, conv_w, conv_b, cls_token, pos_emb, patch_size=P)
    jax.block_until_ready(out)

    # Pure-JAX reference (same bf16 operand rounding, f32 accumulation).
    ref_patches = x.reshape(B, C, S // P, P, S // P, P).transpose(0, 2, 4, 1, 3, 5)
    ref_patches = ref_patches.reshape(B, num_patches, fan_in)
    w_mat = conv_w.reshape(HID, fan_in).T
    proj = jnp.einsum(
        "bpk,kn->bpn",
        ref_patches.astype(jnp.bfloat16).astype(jnp.float32),
        w_mat.astype(jnp.bfloat16).astype(jnp.float32),
        precision=jax.lax.Precision.HIGHEST) + conv_b
    ref = jnp.concatenate([jnp.broadcast_to(cls_token, (B, 1, HID)), proj], axis=1)
    ref = ref + pos_emb  # dropout is identity in eval mode

    assert out.shape == (B, num_patches + 1, HID)
    assert jnp.allclose(out, ref, atol=2e-2, rtol=2e-2), float(
        jnp.max(jnp.abs(out - ref)))

    print("KERNEL_OK")
</pallas_src>

<mosaic_0001>
module attributes {stable_mosaic.version = 11 : i64} {
  func.func @_patch_embed_kernel(%arg0: i32, %arg1: memref<16x128xbf16, #tpu.memory_space<vmem>>, %arg2: memref<128x128xbf16, #tpu.memory_space<vmem>>, %arg3: memref<1x128xf32, #tpu.memory_space<vmem>>, %arg4: memref<16x128xf32, #tpu.memory_space<vmem>>, %arg5: memref<16x128xf32, #tpu.memory_space<vmem>>) attributes {dimension_semantics = [#tpu.dimension_semantics<parallel>], iteration_bounds = array<i64: 2>, scalar_prefetch = 0 : i64, scratch_operands = 0 : i64, tpu.core_type = #tpu.core_type<tc>, window_params = [{transform_indices = @transform_0, window_bounds = array<i64: 16, 128>}, {pipeline_mode = #tpu.pipeline_mode<synchronous>, transform_indices = @transform_1, window_bounds = array<i64: 128, 128>}, {pipeline_mode = #tpu.pipeline_mode<synchronous>, transform_indices = @transform_2, window_bounds = array<i64: 1, 128>}, {pipeline_mode = #tpu.pipeline_mode<synchronous>, transform_indices = @transform_3, window_bounds = array<i64: 16, 128>}, {transform_indices = @transform_4, window_bounds = array<i64: 16, 128>}]} {
    %c0 = arith.constant 0 : index
    %c0_0 = arith.constant 0 : index
    %0 = vector.load %arg1[%c0, %c0_0] : memref<16x128xbf16, #tpu.memory_space<vmem>>, vector<16x128xbf16>
    %c0_1 = arith.constant 0 : index
    %c0_2 = arith.constant 0 : index
    %1 = vector.load %arg2[%c0_1, %c0_2] : memref<128x128xbf16, #tpu.memory_space<vmem>>, vector<128x128xbf16>
    %cst = arith.constant dense<0.000000e+00> : vector<16x128xf32>
    %2 = tpu.matmul %0, %1, %cst {dimension_numbers = #tpu.dot_dimension_numbers<[1], [0], [0], [1], [0, 0, 1, 1], [], []>} : vector<16x128xbf16>, vector<128x128xbf16>, vector<16x128xf32> -> vector<16x128xf32>
    %c0_3 = arith.constant 0 : index
    %c0_4 = arith.constant 0 : index
    %3 = vector.load %arg3[%c0_3, %c0_4] : memref<1x128xf32, #tpu.memory_space<vmem>>, vector<1x128xf32>
    %4 = vector.broadcast %3 : vector<1x128xf32> to vector<16x128xf32>
    %5 = arith.addf %2, %4 : vector<16x128xf32>
    %c0_5 = arith.constant 0 : index
    %c0_6 = arith.constant 0 : index
    %6 = vector.load %arg4[%c0_5, %c0_6] : memref<16x128xf32, #tpu.memory_space<vmem>>, vector<16x128xf32>
    %7 = arith.addf %5, %6 : vector<16x128xf32>
    %c0_7 = arith.constant 0 : index
    %c0_8 = arith.constant 0 : index
    %8 = vector.load %arg5[%c0_7, %c0_8] : memref<16x128xf32, #tpu.memory_space<vmem>>, vector<16x128xf32>
    tpu.vector_store %arg5[%c0_7, %c0_8], %7 {strides = array<i32>} : memref<16x128xf32, #tpu.memory_space<vmem>>, vector<16x128xf32>,
    return
  }
  func.func @transform_0(%arg0: i32) -> (i32, i32) {
    %c0_i32 = arith.constant 0 : i32
    %c0_i32_0 = arith.constant 0 : i32
    return %arg0, %c0_i32 : i32, i32
  }
  func.func @transform_1(%arg0: i32) -> (i32, i32) {
    %c0_i32 = arith.constant 0 : i32
    %c0_i32_0 = arith.constant 0 : i32
    %c0_i32_1 = arith.constant 0 : i32
    return %c0_i32, %c0_i32_0 : i32, i32
  }
  func.func @transform_2(%arg0: i32) -> (i32, i32) {
    %c0_i32 = arith.constant 0 : i32
    %c0_i32_0 = arith.constant 0 : i32
    %c0_i32_1 = arith.constant 0 : i32
    return %c0_i32, %c0_i32_0 : i32, i32
  }
  func.func @transform_3(%arg0: i32) -> (i32, i32) {
    %c0_i32 = arith.constant 0 : i32
    %c0_i32_0 = arith.constant 0 : i32
    %c0_i32_1 = arith.constant 0 : i32
    return %c0_i32, %c0_i32_0 : i32, i32
  }
  func.func @transform_4(%arg0: i32) -> (i32, i32) {
    %c0_i32 = arith.constant 0 : i32
    %c0_i32_0 = arith.constant 0 : i32
    return %arg0, %c0_i32 : i32, i32
  }
}

module attributes {stable_mosaic.version = 11 : i64} {
  func.func @_patch_embed_kernel(%arg0: i32, %arg1: memref<16x128xbf16, #tpu.memory_space<vmem>>, %arg2: memref<128x128xbf16, #tpu.memory_space<vmem>>, %arg3: memref<1x128xf32, #tpu.memory_space<vmem>>, %arg4: memref<16x128xf32, #tpu.memory_space<vmem>>, %arg5: memref<16x128xf32, #tpu.memory_space<vmem>>) attributes {dimension_semantics = [#tpu.dimension_semantics<parallel>], iteration_bounds = array<i64: 2>, scalar_prefetch = 0 : i64, scratch_operands = 0 : i64, tpu.core_type = #tpu.core_type<tc>, window_params = [{transform_indices = @transform_0, window_bounds = array<i64: 16, 128>}, {pipeline_mode = #tpu.pipeline_mode<synchronous>, transform_indices = @transform_1, window_bounds = array<i64: 128, 128>}, {pipeline_mode = #tpu.pipeline_mode<synchronous>, transform_indices = @transform_2, window_bounds = array<i64: 1, 128>}, {pipeline_mode = #tpu.pipeline_mode<synchronous>, transform_indices = @transform_3, window_bounds = array<i64: 16, 128>}, {transform_indices = @transform_4, window_bounds = array<i64: 16, 128>}]} {
    %c0 = arith.constant 0 : index
    %c0_0 = arith.constant 0 : index
    %0 = vector.load %arg1[%c0, %c0_0] : memref<16x128xbf16, #tpu.memory_space<vmem>>, vector<16x128xbf16>
    %c0_1 = arith.constant 0 : index
    %c0_2 = arith.constant 0 : index
    %1 = vector.load %arg2[%c0_1, %c0_2] : memref<128x128xbf16, #tpu.memory_space<vmem>>, vector<128x128xbf16>
    %cst = arith.constant dense<0.000000e+00> : vector<16x128xf32>
    %2 = tpu.matmul %0, %1, %cst {dimension_numbers = #tpu.dot_dimension_numbers<[1], [0], [0], [1], [0, 0, 1, 1], [], []>} : vector<16x128xbf16>, vector<128x128xbf16>, vector<16x128xf32> -> vector<16x128xf32>
    %c0_3 = arith.constant 0 : index
    %c0_4 = arith.constant 0 : index
    %3 = vector.load %arg3[%c0_3, %c0_4] : memref<1x128xf32, #tpu.memory_space<vmem>>, vector<1x128xf32>
    %4 = vector.broadcast %3 : vector<1x128xf32> to vector<16x128xf32>
    %5 = arith.addf %2, %4 : vector<16x128xf32>
    %c0_5 = arith.constant 0 : index
    %c0_6 = arith.constant 0 : index
    %6 = vector.load %arg4[%c0_5, %c0_6] : memref<16x128xf32, #tpu.memory_space<vmem>>, vector<16x128xf32>
    %7 = arith.addf %5, %6 : vector<16x128xf32>
    %c0_7 = arith.constant 0 : index
    %c0_8 = arith.constant 0 : index
    %8 = vector.load %arg5[%c0_7, %c0_8] : memref<16x128xf32, #tpu.memory_space<vmem>>, vector<16x128xf32>
    tpu.vector_store %arg5[%c0_7, %c0_8], %7 {strides = array<i32>} : memref<16x128xf32, #tpu.memory_space<vmem>>, vector<16x128xf32>,
    return
  }
  func.func @transform_0(%arg0: i32) -> (i32, i32) {
    %c0_i32 = arith.constant 0 : i32
    %c0_i32_0 = arith.constant 0 : i32
    return %arg0, %c0_i32 : i32, i32
  }
  func.func @transform_1(%arg0: i32) -> (i32, i32) {
    %c0_i32 = arith.constant 0 : i32
    %c0_i32_0 = arith.constant 0 : i32
    %c0_i32_1 = arith.constant 0 : i32
    return %c0_i32, %c0_i32_0 : i32, i32
  }
  func.func @transform_2(%arg0: i32) -> (i32, i32) {
    %c0_i32 = arith.constant 0 : i32
    %c0_i32_0 = arith.constant 0 : i32
    %c0_i32_1 = arith.constant 0 : i32
    return %c0_i32, %c0_i32_0 : i32, i32
  }
  func.func @transform_3(%arg0: i32) -> (i32, i32) {
    %c0_i32 = arith.constant 0 : i32
    %c0_i32_0 = arith.constant 0 : i32
    %c0_i32_1 = arith.constant 0 : i32
    return %c0_i32, %c0_i32_0 : i32, i32
  }
  func.func @transform_4(%arg0: i32) -> (i32, i32) {
    %c0_i32 = arith.constant 0 : i32
    %c0_i32_0 = arith.constant 0 : i32
    return %arg0, %c0_i32 : i32, i32
  }
}

</mosaic_0001>

<llo_original>
// kernel: _position_embeddings_impl.1
$region0: #{_position_embeddings_impl.1}
  #allocation0 [shape = 'u32[]', space=smem, size = 0x4, offset = 0x4, fixed_abs, tag = 'smem constant byte address 0x4 - core index']
  #allocation1 [shape = 'u32[72,128]{1,0:T(1,128)}', space=vmem, size = 0x9000, scoped, tag = 'internal scratch']
  %s0 = inlined_call_operand.vmem [shape: bf16[32,128], index: 0, kind: input, shape index: {}]
  %s1 = inlined_call_operand.vmem [shape: bf16[128,128], index: 1, kind: input, shape index: {}]
  %s2 = inlined_call_operand.vmem [shape: f32[1,128], index: 2, kind: input, shape index: {}]
  %s3 = inlined_call_operand.vmem [shape: f32[16,128], index: 3, kind: input, shape index: {}]
  %s4 = inlined_call_operand.vmem [shape: f32[32,128], index: 4, kind: output, shape index: {}]
  %s5 = sld [smem:[#allocation0]]
  $region49: #{_position_embeddings_impl.1} parent=0
    _
  %s7 = ssub.s32 1, %s5
  %s8 = scalar_select 0, %s7, %s5
  loop: start=0, step=1, limit=4
  $region2: #{_position_embeddings_impl.1} parent=0 // loop_pre_header
    _
  $region3: #{_position_embeddings_impl.1} parent=0 // loop_header
    %s10 = sphi 0, %s14
    %p11 = scmp.ge.s32.totalorder %s10, 4
    %s20 = sphi 0, %s22
    %s23 = sphi 0, %s20
    %s24 = sphi 0, %s23
    %s40 = sphi 0, %s24
    %s44 = sphi 0, %s44
    %s46 = sphi 0, %s44
    %s47 = sphi 0, %s46
    %s61 = sphi 0, %s47
    %s65 = sphi 0, %s65
    %s67 = sphi 0, %s65
    %s68 = sphi 0, %s67
    %s82 = sphi 0, %s68
    %s86 = sphi 0, %s86
    %s88 = sphi 0, %s86
    %s89 = sphi 0, %s88
    %s103 = sphi 0, %s89
    %s109 = sphi 0, %s111
    %s112 = sphi 0, %s109
    %s113 = sphi 0, %s112
    %s129 = sphi 0, %s113
  $region4: #{_position_embeddings_impl.1} parent=0 // loop_header_branch
    %13 = sbr.rel (%p11) target = $region8
  $region5: #{_position_embeddings_impl.1} parent=0 // loop_body
    %s15 = ssub.s32 %s10, 1
    %s16 = ssub.s32 %s10, 2
    %s17 = sadd.s32 %s10, 1
    %s18 = ssub.s32 %s10, %s17
    %p19 = scmp.eq.s32.totalorder %s18, 0
    %s21 = sadd.s32 %s20, 1
    %s22 = scalar_select %p19, %s20, %s21
    %p25 = pneg %p19
    %p26 = scmp.eq.s32.totalorder %s10, 1
    %p27 = por %p25, %p26
    %p28 = scmp.ne.s32.totalorder %s20, %s23
    %p29 = scmp.eq.s32.totalorder %s10, 0
    %p30 = por %p28, %p29
    %p31 = scmp.ne.s32.totalorder %s20, %s23
    %p32 = scmp.eq.s32.totalorder %s15, 1
    %p33 = por %p31, %p32
    %p34 = scmp.ne.s32.totalorder %s23, %s24
    %p35 = scmp.eq.s32.totalorder %s15, 0
    %p36 = por %p34, %p35
    %p37 = scmp.ne.s32.totalorder %s23, %s24
    %p38 = scmp.eq.s32.totalorder %s16, 1
    %p39 = por %p37, %p38
    %p41 = scmp.ne.s32.totalorder %s24, %s40
    %p42 = scmp.eq.s32.totalorder %s16, 0
    %p43 = por %p41, %p42
    %s45 = sadd.s32 %s44, 1
    %p48 = scmp.eq.s32.totalorder %s10, 1
    %p49 = scmp.ne.s32.totalorder %s44, %s46
    %p50 = scmp.eq.s32.totalorder %s10, 0
    %p51 = por %p49, %p50
    %p52 = scmp.ne.s32.totalorder %s44, %s46
    %p53 = scmp.eq.s32.totalorder %s15, 1
    %p54 = por %p52, %p53
    %p55 = scmp.ne.s32.totalorder %s46, %s47
    %p56 = scmp.eq.s32.totalorder %s15, 0
    %p57 = por %p55, %p56
    %p58 = scmp.ne.s32.totalorder %s46, %s47
    %p59 = scmp.eq.s32.totalorder %s16, 1
    %p60 = por %p58, %p59
    %p62 = scmp.ne.s32.totalorder %s47, %s61
    %p63 = scmp.eq.s32.totalorder %s16, 0
    %p64 = por %p62, %p63
    %s66 = sadd.s32 %s65, 1
    %p69 = scmp.eq.s32.totalorder %s10, 1
    %p70 = scmp.ne.s32.totalorder %s65, %s67
    %p71 = scmp.eq.s32.totalorder %s10, 0
    %p72 = por %p70, %p71
    %p73 = scmp.ne.s32.totalorder %s65, %s67
    %p74 = scmp.eq.s32.totalorder %s15, 1
    %p75 = por %p73, %p74
    %p76 = scmp.ne.s32.totalorder %s67, %s68
    %p77 = scmp.eq.s32.totalorder %s15, 0
    %p78 = por %p76, %p77
    %p79 = scmp.ne.s32.totalorder %s67, %s68
    %p80 = scmp.eq.s32.totalorder %s16, 1
    %p81 = por %p79, %p80
    %p83 = scmp.ne.s32.totalorder %s68, %s82
    %p84 = scmp.eq.s32.totalorder %s16, 0
    %p85 = por %p83, %p84
    %s87 = sadd.s32 %s86, 1
    %p90 = scmp.eq.s32.totalorder %s10, 1
    %p91 = scmp.ne.s32.totalorder %s86, %s88
    %p92 = scmp.eq.s32.totalorder %s10, 0
    %p93 = por %p91, %p92
    %p94 = scmp.ne.s32.totalorder %s86, %s88
    %p95 = scmp.eq.s32.totalorder %s15, 1
    %p96 = por %p94, %p95
    %p97 = scmp.ne.s32.totalorder %s88, %s89
    %p98 = scmp.eq.s32.totalorder %s15, 0
    %p99 = por %p97, %p98
    %p100 = scmp.ne.s32.totalorder %s88, %s89
    %p101 = scmp.eq.s32.totalorder %s16, 1
    %p102 = por %p100, %p101
    %p104 = scmp.ne.s32.totalorder %s89, %s103
    %p105 = scmp.eq.s32.totalorder %s16, 0
    %p106 = por %p104, %p105
    %s107 = ssub.s32 %s10, %s17
    %p108 = scmp.eq.s32.totalorder %s107, 0
    %s110 = sadd.s32 %s109, 1
    %s111 = scalar_select %p108, %s109, %s110
    %p114 = pneg %p108
    %p115 = scmp.eq.s32.totalorder %s10, 1
    %p116 = por %p114, %p115
    %p117 = scmp.ne.s32.totalorder %s109, %s112
    %p118 = scmp.eq.s32.totalorder %s10, 0
    %p119 = por %p117, %p118
    %p120 = scmp.ne.s32.totalorder %s109, %s112
    %p121 = scmp.eq.s32.totalorder %s15, 1
    %p122 = por %p120, %p121
    %p123 = scmp.ne.s32.totalorder %s112, %s113
    %p124 = scmp.eq.s32.totalorder %s15, 0
    %p125 = por %p123, %p124
    %p126 = scmp.ne.s32.totalorder %s112, %s113
    %p127 = scmp.eq.s32.totalorder %s16, 1
    %p128 = por %p126, %p127
    %p130 = scmp.ne.s32.totalorder %s113, %s129
    %p131 = scmp.eq.s32.totalorder %s16, 0
    %p132 = por %p130, %p131
    %p133 = scmp.le.s32.totalorder 1, %s10
    %p134 = scmp.lt.s32.totalorder %s10, 3
    %p135 = pnand %p133, %p134
    %p136 = pneg %p135
    // Predicated region
    $region9: #{_position_embeddings_impl.1} parent=5 // pred_check
      _
    $region10: #{_position_embeddings_impl.1} parent=5 // pred_check_branch
      %138 = sbr.rel (%p135) target = $region12
    $region11: #{_position_embeddings_impl.1} parent=5 // pred_region
      %s139 = ssub.s32 %s10, 1
      // Predicated region
      $region13: #{_position_embeddings_impl.1} parent=11 // pred_check
        %p140 = pneg %p57
      $region14: #{_position_embeddings_impl.1} parent=11 // pred_check_branch
        %142 = sbr.rel (%p140) target = $region16
      $region15: #{_position_embeddings_impl.1} parent=11 // pred_region
        _
      $region16: #{_position_embeddings_impl.1} parent=11 // pred_fallthru
        _
      // Predicated region
      $region17: #{_position_embeddings_impl.1} parent=11 // pred_check
        %p143 = pneg %p78
      $region18: #{_position_embeddings_impl.1} parent=11 // pred_check_branch
        %145 = sbr.rel (%p143) target = $region20
      $region19: #{_position_embeddings_impl.1} parent=11 // pred_region
        _
      $region20: #{_position_embeddings_impl.1} parent=11 // pred_fallthru
        _
      // Predicated region
      $region21: #{_position_embeddings_impl.1} parent=11 // pred_check
        %p146 = pneg %p99
      $region22: #{_position_embeddings_impl.1} parent=11 // pred_check_branch
        %148 = sbr.rel (%p146) target = $region24
      $region23: #{_position_embeddings_impl.1} parent=11 // pred_region
        _
      $region24: #{_position_embeddings_impl.1} parent=11 // pred_fallthru
        _
    $region12: #{_position_embeddings_impl.1} parent=5 // pred_fallthru
      _
    %p149 = scmp.lt.s32.totalorder %s10, 2
    // Predicated region
    $region25: #{_position_embeddings_impl.1} parent=5 // pred_check
      %p150 = pneg %p149
    $region26: #{_position_embeddings_impl.1} parent=5 // pred_check_branch
      %152 = sbr.rel (%p150) target = $region28
    $region27: #{_position_embeddings_impl.1} parent=5 // pred_region
      // Predicated region
      $region29: #{_position_embeddings_impl.1} parent=27 // pred_check
        %p153 = pneg %p30
      $region30: #{_position_embeddings_impl.1} parent=27 // pred_check_branch
        %155 = sbr.rel (%p153) target = $region32
      $region31: #{_position_embeddings_impl.1} parent=27 // pred_region
        %s156 = smul.u32 2, %s10
        %p157 = scmp.lt.s32.totalorder %s156, 3
        %s158 = scalar_select %p157, %s156, 3
        %s159 = smul.addr %s158, 4
        %s160 = scalar_lea.vmem %s0, %s159
        %s161 = smul.u32 2, %s10
      $region32: #{_position_embeddings_impl.1} parent=27 // pred_fallthru
        _
    $region28: #{_position_embeddings_impl.1} parent=5 // pred_fallthru
      _
    %p162 = scmp.le.s32.totalorder 1, %s10
    %p163 = scmp.lt.s32.totalorder %s10, 3
    %p164 = pnand %p162, %p163
    %p165 = pneg %p164
    // Predicated region
    $region33: #{_position_embeddings_impl.1} parent=5 // pred_check
      _
    $region34: #{_position_embeddings_impl.1} parent=5 // pred_check_branch
      %167 = sbr.rel (%p164) target = $region36
    $region35: #{_position_embeddings_impl.1} parent=5 // pred_region
      %s168 = ssub.s32 %s10, 1
      %s169 = smul.u32 2, %s15
      %p170 = scmp.lt.s32.totalorder %s169, 3
      %s171 = scalar_select %p170, %s169, 3
      %s172 = smul.addr %s171, 4
      %s173 = scalar_lea.vmem %s0, %s172
      %p174 = pneg %p36
      %p175 = pneg %p33
      %p176 = pneg %p57
      %p177 = pneg %p54
      %p178 = pneg %p78
      %p179 = pneg %p75
      %p180 = pneg %p99
      %p181 = pneg %p96
      %p182 = pneg %p125
      %p183 = pneg %p122
      %s184 = smul.u32 2, %s15
      %p185 = scmp.lt.s32.totalorder %s184, 3
      %s186 = scalar_select %p185, %s184, 3
      %s187 = smul.addr %s186, 8
      %s188 = scalar_lea.vmem %s4, %s187
      %s189 = smul.u32 2, %s15
      %p190 = scmp.lt.s32.totalorder %s189, 3
      %s191 = scalar_select %p190, %s189, 3
      %s192 = smul.addr %s191, 4
      %s193 = scalar_lea.vmem %s0, %s192
      %s194 = smul.u32 2, %s15
      %s195 = smul.u32 2, %s15
      %p196 = scmp.lt.s32.totalorder %s195, 3
      %s197 = scalar_select %p196, %s195, 3
      %s198 = smul.addr %s197, 8
      %s199 = scalar_lea.vmem %s4, %s198
      %s200 = smul.u32 2, %s15
      %v201 = vld [vmem:[%s193] sm:$0xf]
      %v202 = vld [vmem:[%s193 + $0x4] sm:$0xf]
      %v203 = vld [vmem:[%s1] sm:$0xf]
      %v204 = vld [vmem:[%s1 + $0x4] sm:$0xf]
      %v205 = vld [vmem:[%s1 + $0x8] sm:$0xf]
      %v206 = vld [vmem:[%s1 + $0xc] sm:$0xf]
      %v207 = vld [vmem:[%s1 + $0x10] sm:$0xf]
      %v208 = vld [vmem:[%s1 + $0x14] sm:$0xf]
      %v209 = vld [vmem:[%s1 + $0x18] sm:$0xf]
      %v210 = vld [vmem:[%s1 + $0x1c] sm:$0xf]
      %v211 = vld [vmem:[%s1 + $0x20] sm:$0xf]
      %v212 = vld [vmem:[%s1 + $0x24] sm:$0xf]
      %v213 = vld [vmem:[%s1 + $0x28] sm:$0xf]
      %v214 = vld [vmem:[%s1 + $0x2c] sm:$0xf]
      %v215 = vld [vmem:[%s1 + $0x30] sm:$0xf]
      %v216 = vld [vmem:[%s1 + $0x34] sm:$0xf]
      %v217 = vld [vmem:[%s1 + $0x38] sm:$0xf]
      %v218 = vld [vmem:[%s1 + $0x3c] sm:$0xf]
      %v219 = vld [vmem:[%s2] sm:$0x1]
      %v221 = vperm.slane %v219, 0
      %v225 = vunpack.c.l.b16 %v201
      %v226 = vunpack.c.l.b16 %v202
      %v227 = vpack.c.b16 %v226, %v225
      %v245 = vunpack.c.l.b16 %v203
      %v246 = vunpack.c.l.b16 %v204
      %v247 = vunpack.c.l.b16 %v205
      %v248 = vunpack.c.l.b16 %v206
      %v249 = vunpack.c.l.b16 %v207
      %v250 = vunpack.c.l.b16 %v208
      %v251 = vunpack.c.l.b16 %v209
      %v252 = vunpack.c.l.b16 %v210
      %v253 = vunpack.c.l.b16 %v211
      %v254 = vunpack.c.l.b16 %v212
      %v255 = vunpack.c.l.b16 %v213
      %v256 = vunpack.c.l.b16 %v214
      %v257 = vunpack.c.l.b16 %v215
      %v258 = vunpack.c.l.b16 %v216
      %v259 = vunpack.c.l.b16 %v217
      %v260 = vunpack.c.l.b16 %v218
      %v261 = vpack.c.b16 %v246, %v245
      %v262 = vpack.c.b16 %v248, %v247
      %v263 = vpack.c.b16 %v250, %v249
      %v264 = vpack.c.b16 %v252, %v251
      %v265 = vpack.c.b16 %v254, %v253
      %v266 = vpack.c.b16 %v256, %v255
      %v267 = vpack.c.b16 %v258, %v257
      %v268 = vpack.c.b16 %v260, %v259
      %277 = vmatpush.bf16.msra.mxu0 %v268
      %278 = vmatpush.bf16.msra.mxu0 %v267
      %279 = vmatpush.bf16.msra.mxu0 %v266
      %280 = vmatpush.bf16.msra.mxu0 %v265
      %281 = vmatpush.bf16.msra.mxu0 %v264
      %282 = vmatpush.bf16.msra.mxu0 %v263
      %283 = vmatpush.bf16.msra.mxu0 %v262
      %284 = vmatpush.bf16.msra.mxu0 %v261
      %285 = vmatmul.bf16.gmra.mxu0 %v227
      %v286 = vpop.f32.mrf.mxu0
      %v287 = vadd.f32 %v221, %v286
      %v288 = vpop.f32.mrf.mxu0
      %v289 = vadd.f32 %v221, %v288
      %290 = vdwg.mxu0
      %v291 = vld [vmem:[%s3] sm:$0xff]
      %v292 = vld [vmem:[%s3 + $0x8] sm:$0xff]
      %v293 = vadd.f32 %v287, %v291
      %v294 = vadd.f32 %v289, %v292
      %295 = vst [vmem:[%s199] sm:$0xff] %v293
      %296 = vst [vmem:[%s199 + $0x8] sm:$0xff] %v294
      %s297 = smul.u32 2, %s15
      %p298 = scmp.lt.s32.totalorder %s297, 3
      %s299 = scalar_select %p298, %s297, 3
      %s300 = smul.addr %s299, 8
      %s301 = scalar_lea.vmem %s4, %s300
      // Predicated region
      $region37: #{_position_embeddings_impl.1} parent=35 // pred_check
        %p302 = pneg %p122
      $region38: #{_position_embeddings_impl.1} parent=35 // pred_check_branch
        %304 = sbr.rel (%p302) target = $region40
      $region39: #{_position_embeddings_impl.1} parent=35 // pred_region
        %s305 = smul.u32 2, %s15
      $region40: #{_position_embeddings_impl.1} parent=35 // pred_fallthru
        _
    $region36: #{_position_embeddings_impl.1} parent=5 // pred_fallthru
      _
    %p306 = scmp.le.s32.totalorder 2, %s10
    // Predicated region
    $region41: #{_position_embeddings_impl.1} parent=5 // pred_check
      %p307 = pneg %p306
    $region42: #{_position_embeddings_impl.1} parent=5 // pred_check_branch
      %309 = sbr.rel (%p307) target = $region44
    $region43: #{_position_embeddings_impl.1} parent=5 // pred_region
      %s310 = ssub.s32 %s10, 2
      // Predicated region
      $region45: #{_position_embeddings_impl.1} parent=43 // pred_check
        %p311 = pneg %p128
      $region46: #{_position_embeddings_impl.1} parent=43 // pred_check_branch
        %313 = sbr.rel (%p311) target = $region48
      $region47: #{_position_embeddings_impl.1} parent=43 // pred_region
        %s314 = smul.u32 2, %s16
        %p315 = scmp.lt.s32.totalorder %s314, 3
        %s316 = scalar_select %p315, %s314, 3
        %s317 = smul.addr %s316, 8
        %s318 = scalar_lea.vmem %s4, %s317
      $region48: #{_position_embeddings_impl.1} parent=43 // pred_fallthru
        _
    $region44: #{_position_embeddings_impl.1} parent=5 // pred_fallthru
      _
  $region6: #{_position_embeddings_impl.1} parent=0 // loop_footer
    %s14 = sadd.s32 1, %s10
  $region7: #{_position_embeddings_impl.1} parent=0 // loop_footer_branch
    %9 = sbr.rel target = $region3
  $region8: #{_position_embeddings_impl.1} parent=0 // loop_exit
    _

// kernel: _position_embeddings_impl.1
$region0: #{_position_embeddings_impl.1}
  #allocation0 [shape = 'u32[]', space=smem, size = 0x4, offset = 0x4, fixed_abs, tag = 'smem constant byte address 0x4 - core index']
  #allocation1 [shape = 'u32[72,128]{1,0:T(1,128)}', space=vmem, size = 0x9000, scoped, tag = 'internal scratch']
  %s0 = inlined_call_operand.vmem [shape: bf16[32,128], index: 0, kind: input, shape index: {}]
  %s1 = inlined_call_operand.vmem [shape: bf16[128,128], index: 1, kind: input, shape index: {}]
  %s2 = inlined_call_operand.vmem [shape: f32[1,128], index: 2, kind: input, shape index: {}]
  %s3 = inlined_call_operand.vmem [shape: f32[16,128], index: 3, kind: input, shape index: {}]
  %s4 = inlined_call_operand.vmem [shape: f32[32,128], index: 4, kind: output, shape index: {}]
  %s5 = sld [smem:[#allocation0]]
  $region49: #{_position_embeddings_impl.1} parent=0
    _
  %s7 = ssub.s32 1, %s5
  %s8 = scalar_select 0, %s7, %s5
  loop: start=0, step=1, limit=4
  $region2: #{_position_embeddings_impl.1} parent=0 // loop_pre_header
    _
  $region3: #{_position_embeddings_impl.1} parent=0 // loop_header
    %s10 = sphi 0, %s14
    %p11 = scmp.ge.s32.totalorder %s10, 4
    %s20 = sphi 0, %s22
    %s23 = sphi 0, %s20
    %s24 = sphi 0, %s23
    %s40 = sphi 0, %s24
    %s44 = sphi 0, %s44
    %s46 = sphi 0, %s44
    %s47 = sphi 0, %s46
    %s61 = sphi 0, %s47
    %s65 = sphi 0, %s65
    %s67 = sphi 0, %s65
    %s68 = sphi 0, %s67
    %s82 = sphi 0, %s68
    %s86 = sphi 0, %s86
    %s88 = sphi 0, %s86
    %s89 = sphi 0, %s88
    %s103 = sphi 0, %s89
    %s109 = sphi 0, %s111
    %s112 = sphi 0, %s109
    %s113 = sphi 0, %s112
    %s129 = sphi 0, %s113
  $region4: #{_position_embeddings_impl.1} parent=0 // loop_header_branch
    %13 = sbr.rel (%p11) target = $region8
  $region5: #{_position_embeddings_impl.1} parent=0 // loop_body
    %s15 = ssub.s32 %s10, 1
    %s16 = ssub.s32 %s10, 2
    %s17 = sadd.s32 %s10, 1
    %s18 = ssub.s32 %s10, %s17
    %p19 = scmp.eq.s32.totalorder %s18, 0
    %s21 = sadd.s32 %s20, 1
    %s22 = scalar_select %p19, %s20, %s21
    %p25 = pneg %p19
    %p26 = scmp.eq.s32.totalorder %s10, 1
    %p27 = por %p25, %p26
    %p28 = scmp.ne.s32.totalorder %s20, %s23
    %p29 = scmp.eq.s32.totalorder %s10, 0
    %p30 = por %p28, %p29
    %p31 = scmp.ne.s32.totalorder %s20, %s23
    %p32 = scmp.eq.s32.totalorder %s15, 1
    %p33 = por %p31, %p32
    %p34 = scmp.ne.s32.totalorder %s23, %s24
    %p35 = scmp.eq.s32.totalorder %s15, 0
    %p36 = por %p34, %p35
    %p37 = scmp.ne.s32.totalorder %s23, %s24
    %p38 = scmp.eq.s32.totalorder %s16, 1
    %p39 = por %p37, %p38
    %p41 = scmp.ne.s32.totalorder %s24, %s40
    %p42 = scmp.eq.s32.totalorder %s16, 0
    %p43 = por %p41, %p42
    %s45 = sadd.s32 %s44, 1
    %p48 = scmp.eq.s32.totalorder %s10, 1
    %p49 = scmp.ne.s32.totalorder %s44, %s46
    %p50 = scmp.eq.s32.totalorder %s10, 0
    %p51 = por %p49, %p50
    %p52 = scmp.ne.s32.totalorder %s44, %s46
    %p53 = scmp.eq.s32.totalorder %s15, 1
    %p54 = por %p52, %p53
    %p55 = scmp.ne.s32.totalorder %s46, %s47
    %p56 = scmp.eq.s32.totalorder %s15, 0
    %p57 = por %p55, %p56
    %p58 = scmp.ne.s32.totalorder %s46, %s47
    %p59 = scmp.eq.s32.totalorder %s16, 1
    %p60 = por %p58, %p59
    %p62 = scmp.ne.s32.totalorder %s47, %s61
    %p63 = scmp.eq.s32.totalorder %s16, 0
    %p64 = por %p62, %p63
    %s66 = sadd.s32 %s65, 1
    %p69 = scmp.eq.s32.totalorder %s10, 1
    %p70 = scmp.ne.s32.totalorder %s65, %s67
    %p71 = scmp.eq.s32.totalorder %s10, 0
    %p72 = por %p70, %p71
    %p73 = scmp.ne.s32.totalorder %s65, %s67
    %p74 = scmp.eq.s32.totalorder %s15, 1
    %p75 = por %p73, %p74
    %p76 = scmp.ne.s32.totalorder %s67, %s68
    %p77 = scmp.eq.s32.totalorder %s15, 0
    %p78 = por %p76, %p77
    %p79 = scmp.ne.s32.totalorder %s67, %s68
    %p80 = scmp.eq.s32.totalorder %s16, 1
    %p81 = por %p79, %p80
    %p83 = scmp.ne.s32.totalorder %s68, %s82
    %p84 = scmp.eq.s32.totalorder %s16, 0
    %p85 = por %p83, %p84
    %s87 = sadd.s32 %s86, 1
    %p90 = scmp.eq.s32.totalorder %s10, 1
    %p91 = scmp.ne.s32.totalorder %s86, %s88
    %p92 = scmp.eq.s32.totalorder %s10, 0
    %p93 = por %p91, %p92
    %p94 = scmp.ne.s32.totalorder %s86, %s88
    %p95 = scmp.eq.s32.totalorder %s15, 1
    %p96 = por %p94, %p95
    %p97 = scmp.ne.s32.totalorder %s88, %s89
    %p98 = scmp.eq.s32.totalorder %s15, 0
    %p99 = por %p97, %p98
    %p100 = scmp.ne.s32.totalorder %s88, %s89
    %p101 = scmp.eq.s32.totalorder %s16, 1
    %p102 = por %p100, %p101
    %p104 = scmp.ne.s32.totalorder %s89, %s103
    %p105 = scmp.eq.s32.totalorder %s16, 0
    %p106 = por %p104, %p105
    %s107 = ssub.s32 %s10, %s17
    %p108 = scmp.eq.s32.totalorder %s107, 0
    %s110 = sadd.s32 %s109, 1
    %s111 = scalar_select %p108, %s109, %s110
    %p114 = pneg %p108
    %p115 = scmp.eq.s32.totalorder %s10, 1
    %p116 = por %p114, %p115
    %p117 = scmp.ne.s32.totalorder %s109, %s112
    %p118 = scmp.eq.s32.totalorder %s10, 0
    %p119 = por %p117, %p118
    %p120 = scmp.ne.s32.totalorder %s109, %s112
    %p121 = scmp.eq.s32.totalorder %s15, 1
    %p122 = por %p120, %p121
    %p123 = scmp.ne.s32.totalorder %s112, %s113
    %p124 = scmp.eq.s32.totalorder %s15, 0
    %p125 = por %p123, %p124
    %p126 = scmp.ne.s32.totalorder %s112, %s113
    %p127 = scmp.eq.s32.totalorder %s16, 1
    %p128 = por %p126, %p127
    %p130 = scmp.ne.s32.totalorder %s113, %s129
    %p131 = scmp.eq.s32.totalorder %s16, 0
    %p132 = por %p130, %p131
    %p133 = scmp.le.s32.totalorder 1, %s10
    %p134 = scmp.lt.s32.totalorder %s10, 3
    %p135 = pnand %p133, %p134
    %p136 = pneg %p135
    // Predicated region
    $region9: #{_position_embeddings_impl.1} parent=5 // pred_check
      _
    $region10: #{_position_embeddings_impl.1} parent=5 // pred_check_branch
      %138 = sbr.rel (%p135) target = $region12
    $region11: #{_position_embeddings_impl.1} parent=5 // pred_region
      %s139 = ssub.s32 %s10, 1
      // Predicated region
      $region13: #{_position_embeddings_impl.1} parent=11 // pred_check
        %p140 = pneg %p57
      $region14: #{_position_embeddings_impl.1} parent=11 // pred_check_branch
        %142 = sbr.rel (%p140) target = $region16
      $region15: #{_position_embeddings_impl.1} parent=11 // pred_region
        _
      $region16: #{_position_embeddings_impl.1} parent=11 // pred_fallthru
        _
      // Predicated region
      $region17: #{_position_embeddings_impl.1} parent=11 // pred_check
        %p143 = pneg %p78
      $region18: #{_position_embeddings_impl.1} parent=11 // pred_check_branch
        %145 = sbr.rel (%p143) target = $region20
      $region19: #{_position_embeddings_impl.1} parent=11 // pred_region
        _
      $region20: #{_position_embeddings_impl.1} parent=11 // pred_fallthru
        _
      // Predicated region
      $region21: #{_position_embeddings_impl.1} parent=11 // pred_check
        %p146 = pneg %p99
      $region22: #{_position_embeddings_impl.1} parent=11 // pred_check_branch
        %148 = sbr.rel (%p146) target = $region24
      $region23: #{_position_embeddings_impl.1} parent=11 // pred_region
        _
      $region24: #{_position_embeddings_impl.1} parent=11 // pred_fallthru
        _
    $region12: #{_position_embeddings_impl.1} parent=5 // pred_fallthru
      _
    %p149 = scmp.lt.s32.totalorder %s10, 2
    // Predicated region
    $region25: #{_position_embeddings_impl.1} parent=5 // pred_check
      %p150 = pneg %p149
    $region26: #{_position_embeddings_impl.1} parent=5 // pred_check_branch
      %152 = sbr.rel (%p150) target = $region28
    $region27: #{_position_embeddings_impl.1} parent=5 // pred_region
      // Predicated region
      $region29: #{_position_embeddings_impl.1} parent=27 // pred_check
        %p153 = pneg %p30
      $region30: #{_position_embeddings_impl.1} parent=27 // pred_check_branch
        %155 = sbr.rel (%p153) target = $region32
      $region31: #{_position_embeddings_impl.1} parent=27 // pred_region
        %s156 = smul.u32 2, %s10
        %p157 = scmp.lt.s32.totalorder %s156, 3
        %s158 = scalar_select %p157, %s156, 3
        %s159 = smul.addr %s158, 4
        %s160 = scalar_lea.vmem %s0, %s159
        %s161 = smul.u32 2, %s10
      $region32: #{_position_embeddings_impl.1} parent=27 // pred_fallthru
        _
    $region28: #{_position_embeddings_impl.1} parent=5 // pred_fallthru
      _
    %p162 = scmp.le.s32.totalorder 1, %s10
    %p163 = scmp.lt.s32.totalorder %s10, 3
    %p164 = pnand %p162, %p163
    %p165 = pneg %p164
    // Predicated region
    $region33: #{_position_embeddings_impl.1} parent=5 // pred_check
      _
    $region34: #{_position_embeddings_impl.1} parent=5 // pred_check_branch
      %167 = sbr.rel (%p164) target = $region36
    $region35: #{_position_embeddings_impl.1} parent=5 // pred_region
      %s168 = ssub.s32 %s10, 1
      %s169 = smul.u32 2, %s15
      %p170 = scmp.lt.s32.totalorder %s169, 3
      %s171 = scalar_select %p170, %s169, 3
      %s172 = smul.addr %s171, 4
      %s173 = scalar_lea.vmem %s0, %s172
      %p174 = pneg %p36
      %p175 = pneg %p33
      %p176 = pneg %p57
      %p177 = pneg %p54
      %p178 = pneg %p78
      %p179 = pneg %p75
      %p180 = pneg %p99
      %p181 = pneg %p96
      %p182 = pneg %p125
      %p183 = pneg %p122
      %s184 = smul.u32 2, %s15
      %p185 = scmp.lt.s32.totalorder %s184, 3
      %s186 = scalar_select %p185, %s184, 3
      %s187 = smul.addr %s186, 8
      %s188 = scalar_lea.vmem %s4, %s187
      %s189 = smul.u32 2, %s15
      %p190 = scmp.lt.s32.totalorder %s189, 3
      %s191 = scalar_select %p190, %s189, 3
      %s192 = smul.addr %s191, 4
      %s193 = scalar_lea.vmem %s0, %s192
      %s194 = smul.u32 2, %s15
      %s195 = smul.u32 2, %s15
      %p196 = scmp.lt.s32.totalorder %s195, 3
      %s197 = scalar_select %p196, %s195, 3
      %s198 = smul.addr %s197, 8
      %s199 = scalar_lea.vmem %s4, %s198
      %s200 = smul.u32 2, %s15
      %v201 = vld [vmem:[%s193] sm:$0xf]
      %v202 = vld [vmem:[%s193 + $0x4] sm:$0xf]
      %v203 = vld [vmem:[%s1] sm:$0xf]
      %v204 = vld [vmem:[%s1 + $0x4] sm:$0xf]
      %v205 = vld [vmem:[%s1 + $0x8] sm:$0xf]
      %v206 = vld [vmem:[%s1 + $0xc] sm:$0xf]
      %v207 = vld [vmem:[%s1 + $0x10] sm:$0xf]
      %v208 = vld [vmem:[%s1 + $0x14] sm:$0xf]
      %v209 = vld [vmem:[%s1 + $0x18] sm:$0xf]
      %v210 = vld [vmem:[%s1 + $0x1c] sm:$0xf]
      %v211 = vld [vmem:[%s1 + $0x20] sm:$0xf]
      %v212 = vld [vmem:[%s1 + $0x24] sm:$0xf]
      %v213 = vld [vmem:[%s1 + $0x28] sm:$0xf]
      %v214 = vld [vmem:[%s1 + $0x2c] sm:$0xf]
      %v215 = vld [vmem:[%s1 + $0x30] sm:$0xf]
      %v216 = vld [vmem:[%s1 + $0x34] sm:$0xf]
      %v217 = vld [vmem:[%s1 + $0x38] sm:$0xf]
      %v218 = vld [vmem:[%s1 + $0x3c] sm:$0xf]
      %v219 = vld [vmem:[%s2] sm:$0x1]
      %v221 = vperm.slane %v219, 0
      %v225 = vunpack.c.l.b16 %v201
      %v226 = vunpack.c.l.b16 %v202
      %v227 = vpack.c.b16 %v226, %v225
      %v245 = vunpack.c.l.b16 %v203
      %v246 = vunpack.c.l.b16 %v204
      %v247 = vunpack.c.l.b16 %v205
      %v248 = vunpack.c.l.b16 %v206
      %v249 = vunpack.c.l.b16 %v207
      %v250 = vunpack.c.l.b16 %v208
      %v251 = vunpack.c.l.b16 %v209
      %v252 = vunpack.c.l.b16 %v210
      %v253 = vunpack.c.l.b16 %v211
      %v254 = vunpack.c.l.b16 %v212
      %v255 = vunpack.c.l.b16 %v213
      %v256 = vunpack.c.l.b16 %v214
      %v257 = vunpack.c.l.b16 %v215
      %v258 = vunpack.c.l.b16 %v216
      %v259 = vunpack.c.l.b16 %v217
      %v260 = vunpack.c.l.b16 %v218
      %v261 = vpack.c.b16 %v246, %v245
      %v262 = vpack.c.b16 %v248, %v247
      %v263 = vpack.c.b16 %v250, %v249
      %v264 = vpack.c.b16 %v252, %v251
      %v265 = vpack.c.b16 %v254, %v253
      %v266 = vpack.c.b16 %v256, %v255
      %v267 = vpack.c.b16 %v258, %v257
      %v268 = vpack.c.b16 %v260, %v259
      %277 = vmatpush.bf16.msra.mxu0 %v268
      %278 = vmatpush.bf16.msra.mxu0 %v267
      %279 = vmatpush.bf16.msra.mxu0 %v266
      %280 = vmatpush.bf16.msra.mxu0 %v265
      %281 = vmatpush.bf16.msra.mxu0 %v264
      %282 = vmatpush.bf16.msra.mxu0 %v263
      %283 = vmatpush.bf16.msra.mxu0 %v262
      %284 = vmatpush.bf16.msra.mxu0 %v261
      %285 = vmatmul.bf16.gmra.mxu0 %v227
      %v286 = vpop.f32.mrf.mxu0
      %v287 = vadd.f32 %v221, %v286
      %v288 = vpop.f32.mrf.mxu0
      %v289 = vadd.f32 %v221, %v288
      %290 = vdwg.mxu0
      %v291 = vld [vmem:[%s3] sm:$0xff]
      %v292 = vld [vmem:[%s3 + $0x8] sm:$0xff]
      %v293 = vadd.f32 %v287, %v291
      %v294 = vadd.f32 %v289, %v292
      %295 = vst [vmem:[%s199] sm:$0xff] %v293
      %296 = vst [vmem:[%s199 + $0x8] sm:$0xff] %v294
      %s297 = smul.u32 2, %s15
      %p298 = scmp.lt.s32.totalorder %s297, 3
      %s299 = scalar_select %p298, %s297, 3
      %s300 = smul.addr %s299, 8
      %s301 = scalar_lea.vmem %s4, %s300
      // Predicated region
      $region37: #{_position_embeddings_impl.1} parent=35 // pred_check
        %p302 = pneg %p122
      $region38: #{_position_embeddings_impl.1} parent=35 // pred_check_branch
        %304 = sbr.rel (%p302) target = $region40
      $region39: #{_position_embeddings_impl.1} parent=35 // pred_region
        %s305 = smul.u32 2, %s15
      $region40: #{_position_embeddings_impl.1} parent=35 // pred_fallthru
        _
    $region36: #{_position_embeddings_impl.1} parent=5 // pred_fallthru
      _
    %p306 = scmp.le.s32.totalorder 2, %s10
    // Predicated region
    $region41: #{_position_embeddings_impl.1} parent=5 // pred_check
      %p307 = pneg %p306
    $region42: #{_position_embeddings_impl.1} parent=5 // pred_check_branch
      %309 = sbr.rel (%p307) target = $region44
    $region43: #{_position_embeddings_impl.1} parent=5 // pred_region
      %s310 = ssub.s32 %s10, 2
      // Predicated region
      $region45: #{_position_embeddings_impl.1} parent=43 // pred_check
        %p311 = pneg %p128
      $region46: #{_position_embeddings_impl.1} parent=43 // pred_check_branch
        %313 = sbr.rel (%p311) target = $region48
      $region47: #{_position_embeddings_impl.1} parent=43 // pred_region
        %s314 = smul.u32 2, %s16
        %p315 = scmp.lt.s32.totalorder %s314, 3
        %s316 = scalar_select %p315, %s314, 3
        %s317 = smul.addr %s316, 8
        %s318 = scalar_lea.vmem %s4, %s317
      $region48: #{_position_embeddings_impl.1} parent=43 // pred_fallthru
        _
    $region44: #{_position_embeddings_impl.1} parent=5 // pred_fallthru
      _
  $region6: #{_position_embeddings_impl.1} parent=0 // loop_footer
    %s14 = sadd.s32 1, %s10
  $region7: #{_position_embeddings_impl.1} parent=0 // loop_footer_branch
    %9 = sbr.rel target = $region3
  $region8: #{_position_embeddings_impl.1} parent=0 // loop_exit
    _

</llo_original>
